<compile_context>
chip_gen: v7x
topology: tpu7x:2x2x1
jax: 0.10.0
libtpu: 0.0.40
codegen_flags: <defaults>
</compile_context>

<pallas_src>
import jax
import jax.numpy as jnp
import numpy as np
from jax import lax
from jax.experimental import pallas as pl
from jax.experimental.pallas import tpu as pltpu


def _zipping_kernel(patch_ref, ones_ref, wimg_ref, wones_ref, cond_ref,
                    bias_ref, out_ref):
    # patch_ref : (1, dim*9, HW)  im2col patches of sample b        (VMEM)
    # ones_ref  : (9, HW)         im2col of padded all-ones plane   (VMEM)
    # wimg_ref  : (c_dim, dim*9)  image-channel weights             (VMEM)
    # wones_ref : (c_dim, 9)      constant-plane weights            (VMEM)
    # cond_ref  : (1, c_dim, 1)   conditioning scalars of sample b  (VMEM)
    # bias_ref  : (c_dim, 1)      bias (zeros if use_bias=False)    (VMEM)
    # out_ref   : (1, c_dim, HW)  lane-dense output slab
    acc = jnp.dot(wimg_ref[...], patch_ref[0],
                  preferred_element_type=jnp.float32)          # (c_dim, HW) on MXU
    w_c = wones_ref[...] * cond_ref[0]                         # (c_dim, 9) per-group scale
    acc = acc + jnp.dot(w_c, ones_ref[...],
                        preferred_element_type=jnp.float32)    # constant-plane term
    acc = acc + bias_ref[...]
    out_ref[0] = acc.astype(out_ref.dtype)


def zipping_forward(x, cond, weight, bias, use_bias=True):
    B, dim, H, W = x.shape
    c_dim = cond.shape[1]
    assert weight.shape == (c_dim, dim + 1, 3, 3)
    HW = H * W
    K = dim * 9

    x = x.astype(jnp.float32)
    # --- layout plumbing (wrapper): zero-pad + im2col -> lane-dense patches ---
    xp = jnp.pad(x, ((0, 0), (0, 0), (1, 1), (1, 1)))          # (B, dim, H+2, W+2)
    cols = [xp[:, :, kh:kh + H, kw:kw + W]
            for kh in range(3) for kw in range(3)]             # 9 x (B, dim, H, W)
    patches = jnp.stack(cols, axis=2).reshape(B, K, HW)        # (B, dim*9, HW)

    ones_p = jnp.pad(jnp.ones((H, W), jnp.float32), ((1, 1), (1, 1)))
    ones_patch = jnp.stack(
        [ones_p[kh:kh + H, kw:kw + W].reshape(HW)
         for kh in range(3) for kw in range(3)], axis=0)       # (9, HW)

    w = weight.astype(jnp.float32)
    w_img = w[:, :dim].reshape(c_dim, K)                       # (c_dim, dim*9)
    w_ones = w[:, dim].reshape(c_dim, 9)                       # (c_dim, 9)
    cond3 = cond.astype(jnp.float32).reshape(B, c_dim, 1)
    if use_bias:
        bias2 = bias.astype(jnp.float32).reshape(c_dim, 1)
    else:
        bias2 = jnp.zeros((c_dim, 1), jnp.float32)

    out = pl.pallas_call(
        _zipping_kernel,
        out_shape=jax.ShapeDtypeStruct((B, c_dim, HW), jnp.float32),
        grid_spec=pltpu.PrefetchScalarGridSpec(
            num_scalar_prefetch=0,
            grid=(B,),
            in_specs=[
                pl.BlockSpec((1, K, HW), lambda b: (b, 0, 0)),      # patches[b]
                pl.BlockSpec((9, HW), lambda b: (0, 0)),            # ones_patch
                pl.BlockSpec((c_dim, K), lambda b: (0, 0)),         # w_img
                pl.BlockSpec((c_dim, 9), lambda b: (0, 0)),         # w_ones
                pl.BlockSpec((1, c_dim, 1), lambda b: (b, 0, 0)),   # cond[b]
                pl.BlockSpec((c_dim, 1), lambda b: (0, 0)),         # bias
            ],
            out_specs=pl.BlockSpec((1, c_dim, HW), lambda b: (b, 0, 0)),
        ),
        compiler_params=pltpu.CompilerParams(
            dimension_semantics=("parallel",),   # shard batch across TCs (v7x)
        ),
    )(patches, ones_patch, w_img, w_ones, cond3, bias2)

    return out.reshape(B, c_dim, H, W)


def reference(x, cond, weight, bias):
    """Pure-JAX reference reproducing the PyTorch forward exactly."""
    B, dim, H, W = x.shape
    c_dim = cond.shape[1]
    groups_in = []
    for j in range(c_dim):
        plane = jnp.ones((B, 1, H, W), x.dtype) * cond[:, j][:, None, None, None]
        groups_in.append(jnp.concatenate([x, plane], axis=1))
    inp = jnp.concatenate(groups_in, axis=1)                   # (B, c_dim*(dim+1), H, W)
    out = lax.conv_general_dilated(
        inp, weight, window_strides=(1, 1), padding=((1, 1), (1, 1)),
        dimension_numbers=("NCHW", "OIHW", "NCHW"),
        feature_group_count=c_dim)
    return out + bias[None, :, None, None]


if __name__ == "__main__":
    B, dim, c_dim, H, W = 2, 4, 3, 16, 16   # x: (B, dim, H, W), cond: (B, c_dim)
    key = jax.random.PRNGKey(0)
    k1, k2, k3, k4 = jax.random.split(key, 4)
    x = jax.random.normal(k1, (B, dim, H, W), jnp.float32)
    cond = jax.random.normal(k2, (B, c_dim), jnp.float32)
    # Synthetic params of Conv2d((1+dim)*c_dim, c_dim, 3, padding=1, groups=c_dim)
    weight = jax.random.normal(k3, (c_dim, dim + 1, 3, 3), jnp.float32) * 0.1
    bias = jax.random.normal(k4, (c_dim,), jnp.float32) * 0.1

    out = zipping_forward(x, cond, weight, bias, use_bias=True)
    out = jax.block_until_ready(out)

    ref = reference(x, cond, weight, bias)
    assert out.shape == (B, c_dim, H, W)
    np.testing.assert_allclose(np.asarray(out), np.asarray(ref), rtol=1e-4, atol=1e-4)
    print("KERNEL_OK")
</pallas_src>

<mosaic_0001>
module attributes {stable_mosaic.version = 11 : i64} {
  func.func @_zipping_kernel(%arg0: i32, %arg1: memref<1x36x256xf32, #tpu.memory_space<vmem>>, %arg2: memref<9x256xf32, #tpu.memory_space<vmem>>, %arg3: memref<3x36xf32, #tpu.memory_space<vmem>>, %arg4: memref<3x9xf32, #tpu.memory_space<vmem>>, %arg5: memref<1x3x1xf32, #tpu.memory_space<vmem>>, %arg6: memref<3x1xf32, #tpu.memory_space<vmem>>, %arg7: memref<1x3x256xf32, #tpu.memory_space<vmem>>) attributes {dimension_semantics = [#tpu.dimension_semantics<parallel>], iteration_bounds = array<i64: 2>, scalar_prefetch = 0 : i64, scratch_operands = 0 : i64, tpu.core_type = #tpu.core_type<tc>, window_params = [{transform_indices = @transform_0, window_bounds = array<i64: 1, 36, 256>}, {pipeline_mode = #tpu.pipeline_mode<synchronous>, transform_indices = @transform_1, window_bounds = array<i64: 9, 256>}, {pipeline_mode = #tpu.pipeline_mode<synchronous>, transform_indices = @transform_2, window_bounds = array<i64: 3, 36>}, {pipeline_mode = #tpu.pipeline_mode<synchronous>, transform_indices = @transform_3, window_bounds = array<i64: 3, 9>}, {transform_indices = @transform_4, window_bounds = array<i64: 1, 3, 1>}, {pipeline_mode = #tpu.pipeline_mode<synchronous>, transform_indices = @transform_5, window_bounds = array<i64: 3, 1>}, {transform_indices = @transform_6, window_bounds = array<i64: 1, 3, 256>}]} {
    %c0 = arith.constant 0 : index
    %c0_0 = arith.constant 0 : index
    %0 = vector.load %arg3[%c0, %c0_0] : memref<3x36xf32, #tpu.memory_space<vmem>>, vector<3x36xf32>
    %c0_1 = arith.constant 0 : index
    %c0_2 = arith.constant 0 : index
    %c0_3 = arith.constant 0 : index
    %1 = vector.load %arg1[%c0_1, %c0_2, %c0_3] : memref<1x36x256xf32, #tpu.memory_space<vmem>>, vector<1x36x256xf32>
    %2 = vector.shape_cast %1 : vector<1x36x256xf32> to vector<36x256xf32>
    %cst = arith.constant dense<0.000000e+00> : vector<3x256xf32>
    %3 = tpu.matmul %0, %2, %cst {dimension_numbers = #tpu.dot_dimension_numbers<[1], [0], [0], [1], [0, 0, 1, 1], [], []>} : vector<3x36xf32>, vector<36x256xf32>, vector<3x256xf32> -> vector<3x256xf32>
    %c0_4 = arith.constant 0 : index
    %c0_5 = arith.constant 0 : index
    %4 = vector.load %arg4[%c0_4, %c0_5] : memref<3x9xf32, #tpu.memory_space<vmem>>, vector<3x9xf32>
    %c0_6 = arith.constant 0 : index
    %c0_7 = arith.constant 0 : index
    %c0_8 = arith.constant 0 : index
    %5 = vector.load %arg5[%c0_6, %c0_7, %c0_8] : memref<1x3x1xf32, #tpu.memory_space<vmem>>, vector<1x3x1xf32>
    %6 = vector.shape_cast %5 : vector<1x3x1xf32> to vector<3x1xf32>
    %7 = vector.broadcast %6 : vector<3x1xf32> to vector<3x9xf32>
    %8 = arith.mulf %4, %7 : vector<3x9xf32>
    %c0_9 = arith.constant 0 : index
    %c0_10 = arith.constant 0 : index
    %9 = vector.load %arg2[%c0_9, %c0_10] : memref<9x256xf32, #tpu.memory_space<vmem>>, vector<9x256xf32>
    %cst_11 = arith.constant dense<0.000000e+00> : vector<3x256xf32>
    %10 = tpu.matmul %8, %9, %cst_11 {dimension_numbers = #tpu.dot_dimension_numbers<[1], [0], [0], [1], [0, 0, 1, 1], [], []>} : vector<3x9xf32>, vector<9x256xf32>, vector<3x256xf32> -> vector<3x256xf32>
    %11 = arith.addf %3, %10 : vector<3x256xf32>
    %c0_12 = arith.constant 0 : index
    %c0_13 = arith.constant 0 : index
    %12 = vector.load %arg6[%c0_12, %c0_13] : memref<3x1xf32, #tpu.memory_space<vmem>>, vector<3x1xf32>
    %13 = vector.broadcast %12 : vector<3x1xf32> to vector<3x256xf32>
    %14 = arith.addf %11, %13 : vector<3x256xf32>
    %c0_14 = arith.constant 0 : index
    %c0_15 = arith.constant 0 : index
    %c0_16 = arith.constant 0 : index
    %15 = vector.load %arg7[%c0_14, %c0_15, %c0_16] : memref<1x3x256xf32, #tpu.memory_space<vmem>>, vector<1x3x256xf32>
    %16 = vector.shape_cast %15 : vector<1x3x256xf32> to vector<3x256xf32>
    %17 = vector.shape_cast %14 : vector<3x256xf32> to vector<1x3x256xf32>
    tpu.vector_store %arg7[%c0_14, %c0_15, %c0_16], %17 {strides = array<i32>} : memref<1x3x256xf32, #tpu.memory_space<vmem>>, vector<1x3x256xf32>,
    return
  }
  func.func @transform_0(%arg0: i32) -> (i32, i32, i32) {
    %c0_i32 = arith.constant 0 : i32
    %c0_i32_0 = arith.constant 0 : i32
    %c0_i32_1 = arith.constant 0 : i32
    return %arg0, %c0_i32, %c0_i32_0 : i32, i32, i32
  }
  func.func @transform_1(%arg0: i32) -> (i32, i32) {
    %c0_i32 = arith.constant 0 : i32
    %c0_i32_0 = arith.constant 0 : i32
    %c0_i32_1 = arith.constant 0 : i32
    return %c0_i32, %c0_i32_0 : i32, i32
  }
  func.func @transform_2(%arg0: i32) -> (i32, i32) {
    %c0_i32 = arith.constant 0 : i32
    %c0_i32_0 = arith.constant 0 : i32
    %c0_i32_1 = arith.constant 0 : i32
    return %c0_i32, %c0_i32_0 : i32, i32
  }
  func.func @transform_3(%arg0: i32) -> (i32, i32) {
    %c0_i32 = arith.constant 0 : i32
    %c0_i32_0 = arith.constant 0 : i32
    %c0_i32_1 = arith.constant 0 : i32
    return %c0_i32, %c0_i32_0 : i32, i32
  }
  func.func @transform_4(%arg0: i32) -> (i32, i32, i32) {
    %c0_i32 = arith.constant 0 : i32
    %c0_i32_0 = arith.constant 0 : i32
    %c0_i32_1 = arith.constant 0 : i32
    return %arg0, %c0_i32, %c0_i32_0 : i32, i32, i32
  }
  func.func @transform_5(%arg0: i32) -> (i32, i32) {
    %c0_i32 = arith.constant 0 : i32
    %c0_i32_0 = arith.constant 0 : i32
    %c0_i32_1 = arith.constant 0 : i32
    return %c0_i32, %c0_i32_0 : i32, i32
  }
  func.func @transform_6(%arg0: i32) -> (i32, i32, i32) {
    %c0_i32 = arith.constant 0 : i32
    %c0_i32_0 = arith.constant 0 : i32
    %c0_i32_1 = arith.constant 0 : i32
    return %arg0, %c0_i32, %c0_i32_0 : i32, i32, i32
  }
}

</mosaic_0001>

<llo_original>
// kernel: tpu_custom_call.1
$region0: #{tpu_custom_call.1}
  #allocation0 [shape = 'u32[]', space=smem, size = 0x4, offset = 0x4, fixed_abs, tag = 'smem constant byte address 0x4 - core index']
  #allocation1 [shape = 'u32[144,128]{1,0:T(1,128)}', space=vmem, size = 0x12000, scoped, tag = 'internal scratch']
  %s0 = inlined_call_operand.vmem [shape: f32[2,36,256], index: 0, kind: input, shape index: {}]
  %s1 = inlined_call_operand.vmem [shape: f32[9,256], index: 1, kind: input, shape index: {}]
  %s2 = inlined_call_operand.vmem [shape: f32[3,36], index: 2, kind: input, shape index: {}]
  %s3 = inlined_call_operand.vmem [shape: f32[3,9], index: 3, kind: input, shape index: {}]
  %s4 = inlined_call_operand.vmem [shape: f32[2,3,1], index: 4, kind: input, shape index: {}]
  %s5 = inlined_call_operand.vmem [shape: f32[3,1], index: 5, kind: input, shape index: {}]
  %s6 = inlined_call_operand.vmem [shape: f32[2,3,256], index: 6, kind: output, shape index: {}]
  %s7 = sld [smem:[#allocation0]]
  $region57: #{tpu_custom_call.1} parent=0
    _
  %s9 = ssub.s32 1, %s7
  %s10 = scalar_select 0, %s9, %s7
  loop: start=0, step=1, limit=4
  $region2: #{tpu_custom_call.1} parent=0 // loop_pre_header
    _
  $region3: #{tpu_custom_call.1} parent=0 // loop_header
    %s12 = sphi 0, %s16
    %p13 = scmp.ge.s32.totalorder %s12, 4
    %s22 = sphi 0, %s24
    %s25 = sphi 0, %s22
    %s26 = sphi 0, %s25
    %s42 = sphi 0, %s26
    %s46 = sphi 0, %s46
    %s48 = sphi 0, %s46
    %s49 = sphi 0, %s48
    %s63 = sphi 0, %s49
    %s67 = sphi 0, %s67
    %s69 = sphi 0, %s67
    %s70 = sphi 0, %s69
    %s84 = sphi 0, %s70
    %s88 = sphi 0, %s88
    %s90 = sphi 0, %s88
    %s91 = sphi 0, %s90
    %s105 = sphi 0, %s91
    %s111 = sphi 0, %s113
    %s114 = sphi 0, %s111
    %s115 = sphi 0, %s114
    %s131 = sphi 0, %s115
    %s135 = sphi 0, %s135
    %s137 = sphi 0, %s135
    %s138 = sphi 0, %s137
    %s152 = sphi 0, %s138
    %s158 = sphi 0, %s160
    %s161 = sphi 0, %s158
    %s162 = sphi 0, %s161
    %s178 = sphi 0, %s162
  $region4: #{tpu_custom_call.1} parent=0 // loop_header_branch
    %15 = sbr.rel (%p13) target = $region8
  $region5: #{tpu_custom_call.1} parent=0 // loop_body
    %s17 = ssub.s32 %s12, 1
    %s18 = ssub.s32 %s12, 2
    %s19 = sadd.s32 %s12, 1
    %s20 = ssub.s32 %s12, %s19
    %p21 = scmp.eq.s32.totalorder %s20, 0
    %s23 = sadd.s32 %s22, 1
    %s24 = scalar_select %p21, %s22, %s23
    %p27 = pneg %p21
    %p28 = scmp.eq.s32.totalorder %s12, 1
    %p29 = por %p27, %p28
    %p30 = scmp.ne.s32.totalorder %s22, %s25
    %p31 = scmp.eq.s32.totalorder %s12, 0
    %p32 = por %p30, %p31
    %p33 = scmp.ne.s32.totalorder %s22, %s25
    %p34 = scmp.eq.s32.totalorder %s17, 1
    %p35 = por %p33, %p34
    %p36 = scmp.ne.s32.totalorder %s25, %s26
    %p37 = scmp.eq.s32.totalorder %s17, 0
    %p38 = por %p36, %p37
    %p39 = scmp.ne.s32.totalorder %s25, %s26
    %p40 = scmp.eq.s32.totalorder %s18, 1
    %p41 = por %p39, %p40
    %p43 = scmp.ne.s32.totalorder %s26, %s42
    %p44 = scmp.eq.s32.totalorder %s18, 0
    %p45 = por %p43, %p44
    %s47 = sadd.s32 %s46, 1
    %p50 = scmp.eq.s32.totalorder %s12, 1
    %p51 = scmp.ne.s32.totalorder %s46, %s48
    %p52 = scmp.eq.s32.totalorder %s12, 0
    %p53 = por %p51, %p52
    %p54 = scmp.ne.s32.totalorder %s46, %s48
    %p55 = scmp.eq.s32.totalorder %s17, 1
    %p56 = por %p54, %p55
    %p57 = scmp.ne.s32.totalorder %s48, %s49
    %p58 = scmp.eq.s32.totalorder %s17, 0
    %p59 = por %p57, %p58
    %p60 = scmp.ne.s32.totalorder %s48, %s49
    %p61 = scmp.eq.s32.totalorder %s18, 1
    %p62 = por %p60, %p61
    %p64 = scmp.ne.s32.totalorder %s49, %s63
    %p65 = scmp.eq.s32.totalorder %s18, 0
    %p66 = por %p64, %p65
    %s68 = sadd.s32 %s67, 1
    %p71 = scmp.eq.s32.totalorder %s12, 1
    %p72 = scmp.ne.s32.totalorder %s67, %s69
    %p73 = scmp.eq.s32.totalorder %s12, 0
    %p74 = por %p72, %p73
    %p75 = scmp.ne.s32.totalorder %s67, %s69
    %p76 = scmp.eq.s32.totalorder %s17, 1
    %p77 = por %p75, %p76
    %p78 = scmp.ne.s32.totalorder %s69, %s70
    %p79 = scmp.eq.s32.totalorder %s17, 0
    %p80 = por %p78, %p79
    %p81 = scmp.ne.s32.totalorder %s69, %s70
    %p82 = scmp.eq.s32.totalorder %s18, 1
    %p83 = por %p81, %p82
    %p85 = scmp.ne.s32.totalorder %s70, %s84
    %p86 = scmp.eq.s32.totalorder %s18, 0
    %p87 = por %p85, %p86
    %s89 = sadd.s32 %s88, 1
    %p92 = scmp.eq.s32.totalorder %s12, 1
    %p93 = scmp.ne.s32.totalorder %s88, %s90
    %p94 = scmp.eq.s32.totalorder %s12, 0
    %p95 = por %p93, %p94
    %p96 = scmp.ne.s32.totalorder %s88, %s90
    %p97 = scmp.eq.s32.totalorder %s17, 1
    %p98 = por %p96, %p97
    %p99 = scmp.ne.s32.totalorder %s90, %s91
    %p100 = scmp.eq.s32.totalorder %s17, 0
    %p101 = por %p99, %p100
    %p102 = scmp.ne.s32.totalorder %s90, %s91
    %p103 = scmp.eq.s32.totalorder %s18, 1
    %p104 = por %p102, %p103
    %p106 = scmp.ne.s32.totalorder %s91, %s105
    %p107 = scmp.eq.s32.totalorder %s18, 0
    %p108 = por %p106, %p107
    %s109 = ssub.s32 %s12, %s19
    %p110 = scmp.eq.s32.totalorder %s109, 0
    %s112 = sadd.s32 %s111, 1
    %s113 = scalar_select %p110, %s111, %s112
    %p116 = pneg %p110
    %p117 = scmp.eq.s32.totalorder %s12, 1
    %p118 = por %p116, %p117
    %p119 = scmp.ne.s32.totalorder %s111, %s114
    %p120 = scmp.eq.s32.totalorder %s12, 0
    %p121 = por %p119, %p120
    %p122 = scmp.ne.s32.totalorder %s111, %s114
    %p123 = scmp.eq.s32.totalorder %s17, 1
    %p124 = por %p122, %p123
    %p125 = scmp.ne.s32.totalorder %s114, %s115
    %p126 = scmp.eq.s32.totalorder %s17, 0
    %p127 = por %p125, %p126
    %p128 = scmp.ne.s32.totalorder %s114, %s115
    %p129 = scmp.eq.s32.totalorder %s18, 1
    %p130 = por %p128, %p129
    %p132 = scmp.ne.s32.totalorder %s115, %s131
    %p133 = scmp.eq.s32.totalorder %s18, 0
    %p134 = por %p132, %p133
    %s136 = sadd.s32 %s135, 1
    %p139 = scmp.eq.s32.totalorder %s12, 1
    %p140 = scmp.ne.s32.totalorder %s135, %s137
    %p141 = scmp.eq.s32.totalorder %s12, 0
    %p142 = por %p140, %p141
    %p143 = scmp.ne.s32.totalorder %s135, %s137
    %p144 = scmp.eq.s32.totalorder %s17, 1
    %p145 = por %p143, %p144
    %p146 = scmp.ne.s32.totalorder %s137, %s138
    %p147 = scmp.eq.s32.totalorder %s17, 0
    %p148 = por %p146, %p147
    %p149 = scmp.ne.s32.totalorder %s137, %s138
    %p150 = scmp.eq.s32.totalorder %s18, 1
    %p151 = por %p149, %p150
    %p153 = scmp.ne.s32.totalorder %s138, %s152
    %p154 = scmp.eq.s32.totalorder %s18, 0
    %p155 = por %p153, %p154
    %s156 = ssub.s32 %s12, %s19
    %p157 = scmp.eq.s32.totalorder %s156, 0
    %s159 = sadd.s32 %s158, 1
    %s160 = scalar_select %p157, %s158, %s159
    %p163 = pneg %p157
    %p164 = scmp.eq.s32.totalorder %s12, 1
    %p165 = por %p163, %p164
    %p166 = scmp.ne.s32.totalorder %s158, %s161
    %p167 = scmp.eq.s32.totalorder %s12, 0
    %p168 = por %p166, %p167
    %p169 = scmp.ne.s32.totalorder %s158, %s161
    %p170 = scmp.eq.s32.totalorder %s17, 1
    %p171 = por %p169, %p170
    %p172 = scmp.ne.s32.totalorder %s161, %s162
    %p173 = scmp.eq.s32.totalorder %s17, 0
    %p174 = por %p172, %p173
    %p175 = scmp.ne.s32.totalorder %s161, %s162
    %p176 = scmp.eq.s32.totalorder %s18, 1
    %p177 = por %p175, %p176
    %p179 = scmp.ne.s32.totalorder %s162, %s178
    %p180 = scmp.eq.s32.totalorder %s18, 0
    %p181 = por %p179, %p180
    %p182 = scmp.le.s32.totalorder 1, %s12
    %p183 = scmp.lt.s32.totalorder %s12, 3
    %p184 = pnand %p182, %p183
    %p185 = pneg %p184
    // Predicated region
    $region9: #{tpu_custom_call.1} parent=5 // pred_check
      _
    $region10: #{tpu_custom_call.1} parent=5 // pred_check_branch
      %187 = sbr.rel (%p184) target = $region12
    $region11: #{tpu_custom_call.1} parent=5 // pred_region
      %s188 = ssub.s32 %s12, 1
      // Predicated region
      $region13: #{tpu_custom_call.1} parent=11 // pred_check
        %p189 = pneg %p59
      $region14: #{tpu_custom_call.1} parent=11 // pred_check_branch
        %191 = sbr.rel (%p189) target = $region16
      $region15: #{tpu_custom_call.1} parent=11 // pred_region
        _
      $region16: #{tpu_custom_call.1} parent=11 // pred_fallthru
        _
      // Predicated region
      $region17: #{tpu_custom_call.1} parent=11 // pred_check
        %p192 = pneg %p80
      $region18: #{tpu_custom_call.1} parent=11 // pred_check_branch
        %194 = sbr.rel (%p192) target = $region20
      $region19: #{tpu_custom_call.1} parent=11 // pred_region
        _
      $region20: #{tpu_custom_call.1} parent=11 // pred_fallthru
        _
      // Predicated region
      $region21: #{tpu_custom_call.1} parent=11 // pred_check
        %p195 = pneg %p101
      $region22: #{tpu_custom_call.1} parent=11 // pred_check_branch
        %197 = sbr.rel (%p195) target = $region24
      $region23: #{tpu_custom_call.1} parent=11 // pred_region
        _
      $region24: #{tpu_custom_call.1} parent=11 // pred_fallthru
        _
      // Predicated region
      $region25: #{tpu_custom_call.1} parent=11 // pred_check
        %p198 = pneg %p148
      $region26: #{tpu_custom_call.1} parent=11 // pred_check_branch
        %200 = sbr.rel (%p198) target = $region28
      $region27: #{tpu_custom_call.1} parent=11 // pred_region
        _
      $region28: #{tpu_custom_call.1} parent=11 // pred_fallthru
        _
    $region12: #{tpu_custom_call.1} parent=5 // pred_fallthru
      _
    %p201 = scmp.lt.s32.totalorder %s12, 2
    // Predicated region
    $region29: #{tpu_custom_call.1} parent=5 // pred_check
      %p202 = pneg %p201
    $region30: #{tpu_custom_call.1} parent=5 // pred_check_branch
      %204 = sbr.rel (%p202) target = $region32
    $region31: #{tpu_custom_call.1} parent=5 // pred_region
      // Predicated region
      $region33: #{tpu_custom_call.1} parent=31 // pred_check
        %p205 = pneg %p32
      $region34: #{tpu_custom_call.1} parent=31 // pred_check_branch
        %207 = sbr.rel (%p205) target = $region36
      $region35: #{tpu_custom_call.1} parent=31 // pred_region
        %p208 = scmp.lt.s32.totalorder %s12, 1
        %s209 = scalar_select %p208, %s12, 1
        %s210 = smul.addr %s209, 10
        %s211 = smul.addr %s210, 8
        %s212 = scalar_lea.vmem %s0, %s211
      $region36: #{tpu_custom_call.1} parent=31 // pred_fallthru
        _
      // Predicated region
      $region37: #{tpu_custom_call.1} parent=31 // pred_check
        %p213 = pneg %p121
      $region38: #{tpu_custom_call.1} parent=31 // pred_check_branch
        %215 = sbr.rel (%p213) target = $region40
      $region39: #{tpu_custom_call.1} parent=31 // pred_region
        %p216 = scmp.lt.s32.totalorder %s12, 1
        %s217 = scalar_select %p216, %s12, 1
        %s218 = smul.addr %s217, 4
        %s219 = scalar_lea.vmem %s4, %s218
      $region40: #{tpu_custom_call.1} parent=31 // pred_fallthru
        _
    $region32: #{tpu_custom_call.1} parent=5 // pred_fallthru
      _
    %p220 = scmp.le.s32.totalorder 1, %s12
    %p221 = scmp.lt.s32.totalorder %s12, 3
    %p222 = pnand %p220, %p221
    %p223 = pneg %p222
    // Predicated region
    $region41: #{tpu_custom_call.1} parent=5 // pred_check
      _
    $region42: #{tpu_custom_call.1} parent=5 // pred_check_branch
      %225 = sbr.rel (%p222) target = $region44
    $region43: #{tpu_custom_call.1} parent=5 // pred_region
      %s226 = ssub.s32 %s12, 1
      %p227 = scmp.lt.s32.totalorder %s17, 1
      %s228 = scalar_select %p227, %s17, 1
      %s229 = smul.addr %s228, 10
      %s230 = smul.addr %s229, 8
      %s231 = scalar_lea.vmem %s0, %s230
      %p232 = pneg %p38
      %p233 = pneg %p35
      %p234 = pneg %p59
      %p235 = pneg %p56
      %p236 = pneg %p80
      %p237 = pneg %p77
      %p238 = pneg %p101
      %p239 = pneg %p98
      %p240 = scmp.lt.s32.totalorder %s17, 1
      %s241 = scalar_select %p240, %s17, 1
      %s242 = smul.addr %s241, 4
      %s243 = scalar_lea.vmem %s4, %s242
      %p244 = pneg %p127
      %p245 = pneg %p124
      %p246 = pneg %p148
      %p247 = pneg %p145
      %p248 = pneg %p174
      %p249 = pneg %p171
      %p250 = scmp.lt.s32.totalorder %s17, 1
      %s251 = scalar_select %p250, %s17, 1
      %s252 = smul.addr %s251, 2
      %s253 = smul.addr %s252, 4
      %s254 = scalar_lea.vmem %s6, %s253
      %p255 = scmp.lt.s32.totalorder %s17, 1
      %s256 = scalar_select %p255, %s17, 1
      %s257 = smul.addr %s256, 10
      %s258 = smul.addr %s257, 8
      %s259 = scalar_lea.vmem %s0, %s258
      %p260 = scmp.lt.s32.totalorder %s17, 1
      %s261 = scalar_select %p260, %s17, 1
      %s262 = smul.addr %s261, 4
      %s263 = scalar_lea.vmem %s4, %s262
      %p264 = scmp.lt.s32.totalorder %s17, 1
      %s265 = scalar_select %p264, %s17, 1
      %s266 = smul.addr %s265, 2
      %s267 = smul.addr %s266, 4
      %s268 = scalar_lea.vmem %s6, %s267
      %v269 = vld [vmem:[%s2] sm:$0x7]
      %v270 = vld [vmem:[%s259] sm:$0xff]
      %v271 = vld [vmem:[%s259 + $0x8] sm:$0xff]
      %v272 = vld [vmem:[%s259 + $0x10] sm:$0xff]
      %v273 = vld [vmem:[%s259 + $0x18] sm:$0xff]
      %v274 = vld [vmem:[%s259 + $0x20] sm:$0xff]
      %v275 = vld [vmem:[%s259 + $0x28] sm:$0xff]
      %v276 = vld [vmem:[%s259 + $0x30] sm:$0xff]
      %v277 = vld [vmem:[%s259 + $0x38] sm:$0xff]
      %v278 = vld [vmem:[%s259 + $0x40] sm:$0xf]
      %v279 = vld [vmem:[%s259 + $0x48] sm:$0xf]
      %v280 = vld [vmem:[%s3] sm:$0x7]
      %v281 = vld [vmem:[%s263] sm:$0x7]
      %283 = vset.pattern.permute.xlu0 0
      %284 = vperm.xlu0 %283, %v281
      %v285 = vpop.permute.xlu0 %284
      %v287 = vmul.f32 %v280, %v285
      %v288 = vld [vmem:[%s1] sm:$0xff]
      %v289 = vld [vmem:[%s1 + $0x8] sm:$0xff]
      %v290 = vld [vmem:[%s1 + $0x10] sm:$0x1]
      %v291 = vld [vmem:[%s1 + $0x18] sm:$0x1]
      %vm292 = vcmask 72704
      %v294 = vsel %vm292, %v287, 0
      %vm296 = vcmask 1040384
      %v298 = vsel %vm296, %v290, 0
      %v301 = vsel %vm296, %v291, 0
      %303 = vmatprep.subr.mxu0 %v289
      %304 = vmatpush1.msra.mxu0 %v288
      %305 = vmatprep.subr.mxu0 %v301
      %306 = vmatpush1.msra.mxu0 %v298
      %307 = vmatprep.subr.mxu0 0.0
      %308 = vmatpush1.msra.mxu0 0.0
      %309 = vmatprep.subr.mxu0 0.0
      %310 = vmatpush1.msra.mxu0 0.0
      %311 = vmatprep.subr.mxu0 0.0
      %312 = vmatpush1.msra.mxu0 0.0
      %313 = vmatprep.subr.mxu0 0.0
      %314 = vmatpush1.msra.mxu0 0.0
      %315 = vmatprep.subr.mxu0 0.0
      %316 = vmatpush1.msra.mxu0 0.0
      %317 = vmatprep.subr.mxu0 0.0
      %318 = vmatpush1.msra.mxu0 0.0
      %319 = vmatprep.subr.mxu0 0.0
      %320 = vmatpush1.msra.mxu0 0.0
      %321 = vmatprep.subr.mxu0 0.0
      %322 = vmatpush1.msra.mxu0 0.0
      %323 = vmatprep.subr.mxu0 0.0
      %324 = vmatpush1.msra.mxu0 0.0
      %325 = vmatprep.subr.mxu0 0.0
      %326 = vmatpush1.msra.mxu0 0.0
      %327 = vmatprep.subr.mxu0 0.0
      %328 = vmatpush1.msra.mxu0 0.0
      %329 = vmatprep.subr.mxu0 0.0
      %330 = vmatpush1.msra.mxu0 0.0
      %331 = vmatprep.subr.mxu0 0.0
      %332 = vmatpush1.msra.mxu0 0.0
      %333 = vmatprep.subr.mxu0 0.0
      %334 = vmatpush1.msra.mxu0 0.0
      %335 = vmatprep.subr.mxu0 0.0
      %336 = vmatpush1.msra.mxu0 0.0
      %337 = vmatprep.subr.mxu0 0.0
      %338 = vmatpush1.msra.mxu0 0.0
      %339 = vmatprep.subr.mxu0 0.0
      %340 = vmatpush1.msra.mxu0 0.0
      %341 = vmatprep.subr.mxu0 0.0
      %342 = vmatpush1.msra.mxu0 0.0
      %343 = vmatprep.subr.mxu0 0.0
      %344 = vmatpush1.msra.mxu0 0.0
      %345 = vmatprep.subr.mxu0 0.0
      %346 = vmatpush1.msra.mxu0 0.0
      %347 = vmatprep.subr.mxu0 0.0
      %348 = vmatpush1.msra.mxu0 0.0
      %349 = vmatprep.subr.mxu0 0.0
      %350 = vmatpush1.msra.mxu0 0.0
      %351 = vmatprep.subr.mxu0 0.0
      %352 = vmatpush1.msra.mxu0 0.0
      %353 = vmatprep.subr.mxu0 0.0
      %354 = vmatpush1.msra.mxu0 0.0
      %355 = vmatprep.subr.mxu0 0.0
      %356 = vmatpush1.msra.mxu0 0.0
      %357 = vmatprep.subr.mxu0 0.0
      %358 = vmatpush1.msra.mxu0 0.0
      %359 = vmatprep.subr.mxu0 0.0
      %360 = vmatpush1.msra.mxu0 0.0
      %361 = vmatprep.subr.mxu0 0.0
      %362 = vmatpush1.msra.mxu0 0.0
      %363 = vmatprep.subr.mxu0 0.0
      %364 = vmatpush1.msra.mxu0 0.0
      %365 = vmatprep.subr.mxu0 0.0
      %366 = vmatpush1.msra.mxu0 0.0
      %367 = vmatprep.mubr.f32.mxu0 0.0
      %368 = vmatmul.mubr.f32.gmra.mrb[0].mxu0 %v294
      %v369 = vpop.f32.mrb[0].mxu0
      %v370 = vadd.f32 0.0, %v369
      %v371 = vpop.f32.mrb[0].mxu0
      %v372 = vadd.f32 0.0, %v371
      %373 = vdwg.mxu0
      %vm374 = vcmask 293888
      %v376 = vsel %vm374, %v269, 0
      %vm378 = vcmask 1043456
      %v380 = vsel %vm378, %v278, 0
      %v383 = vsel %vm378, %v279, 0
      %385 = vmatprep.subr.mxu0 %v271
      %386 = vmatpush1.msra.mxu0 %v270
      %387 = vmatprep.subr.mxu0 %v273
      %388 = vmatpush1.msra.mxu0 %v272
      %389 = vmatprep.subr.mxu0 %v275
      %390 = vmatpush1.msra.mxu0 %v274
      %391 = vmatprep.subr.mxu0 %v277
      %392 = vmatpush1.msra.mxu0 %v276
      %393 = vmatprep.subr.mxu0 %v383
      %394 = vmatpush1.msra.mxu0 %v380
      %395 = vmatprep.subr.mxu0 0.0
      %396 = vmatpush1.msra.mxu0 0.0
      %397 = vmatprep.subr.mxu0 0.0
      %398 = vmatpush1.msra.mxu0 0.0
      %399 = vmatprep.subr.mxu0 0.0
      %400 = vmatpush1.msra.mxu0 0.0
      %401 = vmatprep.subr.mxu0 0.0
      %402 = vmatpush1.msra.mxu0 0.0
      %403 = vmatprep.subr.mxu0 0.0
      %404 = vmatpush1.msra.mxu0 0.0
      %405 = vmatprep.subr.mxu0 0.0
      %406 = vmatpush1.msra.mxu0 0.0
      %407 = vmatprep.subr.mxu0 0.0
      %408 = vmatpush1.msra.mxu0 0.0
      %409 = vmatprep.subr.mxu0 0.0
      %410 = vmatpush1.msra.mxu0 0.0
      %411 = vmatprep.subr.mxu0 0.0
      %412 = vmatpush1.msra.mxu0 0.0
      %413 = vmatprep.subr.mxu0 0.0
      %414 = vmatpush1.msra.mxu0 0.0
      %415 = vmatprep.subr.mxu0 0.0
      %416 = vmatpush1.msra.mxu0 0.0
      %417 = vmatprep.subr.mxu0 0.0
      %418 = vmatpush1.msra.mxu0 0.0
      %419 = vmatprep.subr.mxu0 0.0
      %420 = vmatpush1.msra.mxu0 0.0
      %421 = vmatprep.subr.mxu0 0.0
      %422 = vmatpush1.msra.mxu0 0.0
      %423 = vmatprep.subr.mxu0 0.0
      %424 = vmatpush1.msra.mxu0 0.0
      %425 = vmatprep.subr.mxu0 0.0
      %426 = vmatpush1.msra.mxu0 0.0
      %427 = vmatprep.subr.mxu0 0.0
      %428 = vmatpush1.msra.mxu0 0.0
      %429 = vmatprep.subr.mxu0 0.0
      %430 = vmatpush1.msra.mxu0 0.0
      %431 = vmatprep.subr.mxu0 0.0
      %432 = vmatpush1.msra.mxu0 0.0
      %433 = vmatprep.subr.mxu0 0.0
      %434 = vmatpush1.msra.mxu0 0.0
      %435 = vmatprep.subr.mxu0 0.0
      %436 = vmatpush1.msra.mxu0 0.0
      %437 = vmatprep.subr.mxu0 0.0
      %438 = vmatpush1.msra.mxu0 0.0
      %439 = vmatprep.subr.mxu0 0.0
      %440 = vmatpush1.msra.mxu0 0.0
      %441 = vmatprep.subr.mxu0 0.0
      %442 = vmatpush1.msra.mxu0 0.0
      %443 = vmatprep.subr.mxu0 0.0
      %444 = vmatpush1.msra.mxu0 0.0
      %445 = vmatprep.subr.mxu0 0.0
      %446 = vmatpush1.msra.mxu0 0.0
      %447 = vmatprep.subr.mxu0 0.0
      %448 = vmatpush1.msra.mxu0 0.0
      %449 = vmatprep.mubr.f32.mxu0 0.0
      %450 = vmatmul.mubr.f32.gmra.mrb[0].mxu0 %v376
      %v451 = vpop.f32.mrb[0].mxu0
      %v452 = vadd.f32 %v370, %v451
      %v453 = vpop.f32.mrb[0].mxu0
      %v454 = vadd.f32 %v372, %v453
      %455 = vdwg.mxu0
      %v456 = vld [vmem:[%s5] sm:$0x7]
      %458 = vset.pattern.permute.xlu0 0
      %459 = vperm.xlu0 %458, %v456
      %v460 = vpop.permute.xlu0 %459
      %v462 = vadd.f32 %v452, %v460
      %v463 = vadd.f32 %v454, %v460
      %v466 = vcombine.low %v462, %v463
      %468 = vst [vmem:[%s268] sm:$0x77] %v466
      %p469 = scmp.lt.s32.totalorder %s17, 1
      %s470 = scalar_select %p469, %s17, 1
      %s471 = smul.addr %s470, 2
      %s472 = smul.addr %s471, 4
      %s473 = scalar_lea.vmem %s6, %s472
      // Predicated region
      $region45: #{tpu_custom_call.1} parent=43 // pred_check
        %p474 = pneg %p171
      $region46: #{tpu_custom_call.1} parent=43 // pred_check_branch
        %476 = sbr.rel (%p474) target = $region48
      $region47: #{tpu_custom_call.1} parent=43 // pred_region
        _
      $region48: #{tpu_custom_call.1} parent=43 // pred_fallthru
        _
    $region44: #{tpu_custom_call.1} parent=5 // pred_fallthru
      _
    %p477 = scmp.le.s32.totalorder 2, %s12
    // Predicated region
    $region49: #{tpu_custom_call.1} parent=5 // pred_check
      %p478 = pneg %p477
    $region50: #{tpu_custom_call.1} parent=5 // pred_check_branch
      %480 = sbr.rel (%p478) target = $region52
    $region51: #{tpu_custom_call.1} parent=5 // pred_region
      %s481 = ssub.s32 %s12, 2
      // Predicated region
      $region53: #{tpu_custom_call.1} parent=51 // pred_check
        %p482 = pneg %p177
      $region54: #{tpu_custom_call.1} parent=51 // pred_check_branch
        %484 = sbr.rel (%p482) target = $region56
      $region55: #{tpu_custom_call.1} parent=51 // pred_region
        %p485 = scmp.lt.s32.totalorder %s18, 1
        %s486 = scalar_select %p485, %s18, 1
        %s487 = smul.addr %s486, 2
        %s488 = smul.addr %s487, 4
        %s489 = scalar_lea.vmem %s6, %s488
      $region56: #{tpu_custom_call.1} parent=51 // pred_fallthru
        _
    $region52: #{tpu_custom_call.1} parent=5 // pred_fallthru
      _
  $region6: #{tpu_custom_call.1} parent=0 // loop_footer
    %s16 = sadd.s32 1, %s12
  $region7: #{tpu_custom_call.1} parent=0 // loop_footer_branch
    %11 = sbr.rel target = $region3
  $region8: #{tpu_custom_call.1} parent=0 // loop_exit
    _

</llo_original>
